<compile_context>
chip_gen: v7x
topology: tpu7x:2x2x1
jax: 0.10.0
libtpu: 0.0.40
codegen_flags: <defaults>
</compile_context>

<pallas_src>
import functools

import jax
import jax.numpy as jnp
from jax.experimental import pallas as pl
from jax.experimental.pallas import tpu as pltpu

LANE = 128  # TPU lane width; final layer is padded to a multiple of this.


def _round_up(n, m):
    return ((n + m - 1) // m) * m


def mlp_kernel(x_ref,
               w1_ref, b1_ref,
               w2_ref, b2_ref,
               w3_ref, b3_ref,
               w4_ref, b4_ref,
               o_ref):
    """Fused 4-layer MLP on one batch tile: bf16 matmuls, f32 accumulate."""
    # TODO(synk): Dropout(0.3) layers are identity in eval mode; training-mode
    # stochastic masking is not implemented here.
    h = x_ref[...].astype(jnp.bfloat16)

    # Layer 1: input_size -> 512, ReLU
    h = jnp.dot(h, w1_ref[...], preferred_element_type=jnp.float32) + b1_ref[...]
    h = jnp.maximum(h, 0.0).astype(jnp.bfloat16)

    # Layer 2: 512 -> 256, ReLU
    h = jnp.dot(h, w2_ref[...], preferred_element_type=jnp.float32) + b2_ref[...]
    h = jnp.maximum(h, 0.0).astype(jnp.bfloat16)

    # Layer 3: 256 -> 128, ReLU
    h = jnp.dot(h, w3_ref[...], preferred_element_type=jnp.float32) + b3_ref[...]
    h = jnp.maximum(h, 0.0).astype(jnp.bfloat16)

    # Layer 4: 128 -> padded num_classes (lane-dense 128-wide store).
    o_ref[...] = (jnp.dot(h, w4_ref[...], preferred_element_type=jnp.float32)
                  + b4_ref[...]).astype(o_ref.dtype)


@functools.partial(jax.jit, static_argnames=("num_classes", "batch_tile"))
def mlp_classifier_forward(x, params, *, num_classes, batch_tile=128):
    """Run the fused MLP kernel.

    x: [B, input_size] float32.
    params: (w1,b1,...,w4,b4); weights bf16 [in,out], biases f32 [1,out];
            w4/b4 have out-dim = num_classes (padded to 128 lanes here).
    Returns [B, num_classes] float32 logits.
    """
    (w1, b1, w2, b2, w3, b3, w4, b4) = params
    B, input_size = x.shape

    # Lane-pad the final layer so the output store is lane-dense.
    out_pad = _round_up(max(num_classes, 1), LANE)
    if w4.shape[1] != out_pad:
        w4 = jnp.pad(w4, ((0, 0), (0, out_pad - w4.shape[1])))
        b4 = jnp.pad(b4, ((0, 0), (0, out_pad - b4.shape[1])))

    # Batch tiling: single step for small B (padded to a 16-row tile for clean
    # bf16 packing), TB=batch_tile tiles sharded across cores for large B.
    if B <= batch_tile:
        TB = _round_up(max(B, 1), 16)
    else:
        TB = batch_tile
    Bp = _round_up(B, TB)
    if Bp != B:
        x = jnp.pad(x, ((0, Bp - B), (0, 0)))

    grid = (Bp // TB,)

    resident = lambda arr: pl.BlockSpec(arr.shape, lambda i: (0,) * arr.ndim)

    out = pl.pallas_call(
        mlp_kernel,
        out_shape=jax.ShapeDtypeStruct((Bp, out_pad), jnp.float32),
        grid=grid,
        in_specs=[
            pl.BlockSpec((TB, input_size), lambda i: (i, 0)),   # x: tiled on batch
            resident(w1), resident(b1),                         # weights/biases stay
            resident(w2), resident(b2),                         # VMEM-resident
            resident(w3), resident(b3),                         # (constant block idx)
            resident(w4), resident(b4),
        ],
        out_specs=pl.BlockSpec((TB, out_pad), lambda i: (i, 0)),
        compiler_params=pltpu.CompilerParams(
            dimension_semantics=("parallel",)),
    )(x, w1, b1, w2, b2, w3, b3, w4, b4)

    return out[:B, :num_classes]


def init_params(key, input_size, num_classes):
    """Deterministic synthetic parameters matching the nn.Sequential shapes.

    PyTorch Linear stores W as [out, in]; here W is [in, out] so the kernel does
    x @ W + b directly.  Weights bf16, biases f32 [1, out].
    """
    dims = [(input_size, 512), (512, 256), (256, 128), (128, num_classes)]
    params = []
    for (fan_in, fan_out) in dims:
        key, kw, kb = jax.random.split(key, 3)
        bound = 1.0 / jnp.sqrt(fan_in)
        w = jax.random.uniform(kw, (fan_in, fan_out), jnp.float32, -bound, bound)
        b = jax.random.uniform(kb, (1, fan_out), jnp.float32, -bound, bound)
        params += [w.astype(jnp.bfloat16), b]
    return tuple(params)


def reference_forward(x, params):
    """Plain-JAX reference with the same mixed precision (bf16 dots, f32 acc)."""
    (w1, b1, w2, b2, w3, b3, w4, b4) = params
    h = x.astype(jnp.bfloat16)
    h = jnp.maximum(jnp.dot(h, w1, preferred_element_type=jnp.float32) + b1, 0.0)
    h = jnp.maximum(jnp.dot(h.astype(jnp.bfloat16), w2,
                            preferred_element_type=jnp.float32) + b2, 0.0)
    h = jnp.maximum(jnp.dot(h.astype(jnp.bfloat16), w3,
                            preferred_element_type=jnp.float32) + b3, 0.0)
    return jnp.dot(h.astype(jnp.bfloat16), w4,
                   preferred_element_type=jnp.float32) + b4


if __name__ == "__main__":
    # Small, synthetic shapes consistent with the module: embedding vector in,
    # class logits out.
    input_size = 384     # stand-in for embeddings.shape[1]
    num_classes = 10     # stand-in for len(label_encoder.classes_)

    key = jax.random.PRNGKey(0)
    key, kx1, kx2 = jax.random.split(key, 3)
    params = init_params(key, input_size, num_classes)

    # Case 1: tiny batch (single grid step).
    x_small = jax.random.normal(kx1, (8, input_size), dtype=jnp.float32)
    out_small = jax.block_until_ready(
        mlp_classifier_forward(x_small, params, num_classes=num_classes))
    ref_small = reference_forward(x_small, params)
    assert out_small.shape == (8, num_classes)
    assert jnp.allclose(out_small, ref_small, atol=2e-2, rtol=2e-2), \
        "small-batch mismatch vs reference"

    # Case 2: larger ragged batch (exercises the parallel batch grid + padding).
    x_big = jax.random.normal(kx2, (200, input_size), dtype=jnp.float32)
    out_big = jax.block_until_ready(
        mlp_classifier_forward(x_big, params, num_classes=num_classes,
                               batch_tile=128))
    ref_big = reference_forward(x_big, params)
    assert out_big.shape == (200, num_classes)
    assert jnp.allclose(out_big, ref_big, atol=2e-2, rtol=2e-2), \
        "large-batch mismatch vs reference"

    print("KERNEL_OK")
</pallas_src>

<mosaic_0001>
module attributes {stable_mosaic.version = 11 : i64} {
  func.func @mlp_kernel(%arg0: i32, %arg1: memref<16x384xf32, #tpu.memory_space<vmem>>, %arg2: memref<384x512xbf16, #tpu.memory_space<vmem>>, %arg3: memref<1x512xf32, #tpu.memory_space<vmem>>, %arg4: memref<512x256xbf16, #tpu.memory_space<vmem>>, %arg5: memref<1x256xf32, #tpu.memory_space<vmem>>, %arg6: memref<256x128xbf16, #tpu.memory_space<vmem>>, %arg7: memref<1x128xf32, #tpu.memory_space<vmem>>, %arg8: memref<128x128xbf16, #tpu.memory_space<vmem>>, %arg9: memref<1x128xf32, #tpu.memory_space<vmem>>, %arg10: memref<16x128xf32, #tpu.memory_space<vmem>>) attributes {dimension_semantics = [#tpu.dimension_semantics<parallel>], iteration_bounds = array<i64: 1>, scalar_prefetch = 0 : i64, scratch_operands = 0 : i64, tpu.core_type = #tpu.core_type<tc>, window_params = [{transform_indices = @transform_0, window_bounds = array<i64: 16, 384>}, {pipeline_mode = #tpu.pipeline_mode<synchronous>, transform_indices = @transform_1, window_bounds = array<i64: 384, 512>}, {pipeline_mode = #tpu.pipeline_mode<synchronous>, transform_indices = @transform_2, window_bounds = array<i64: 1, 512>}, {pipeline_mode = #tpu.pipeline_mode<synchronous>, transform_indices = @transform_3, window_bounds = array<i64: 512, 256>}, {pipeline_mode = #tpu.pipeline_mode<synchronous>, transform_indices = @transform_4, window_bounds = array<i64: 1, 256>}, {pipeline_mode = #tpu.pipeline_mode<synchronous>, transform_indices = @transform_5, window_bounds = array<i64: 256, 128>}, {pipeline_mode = #tpu.pipeline_mode<synchronous>, transform_indices = @transform_6, window_bounds = array<i64: 1, 128>}, {pipeline_mode = #tpu.pipeline_mode<synchronous>, transform_indices = @transform_7, window_bounds = array<i64: 128, 128>}, {pipeline_mode = #tpu.pipeline_mode<synchronous>, transform_indices = @transform_8, window_bounds = array<i64: 1, 128>}, {transform_indices = @transform_9, window_bounds = array<i64: 16, 128>}]} {
    %c0 = arith.constant 0 : index
    %c0_0 = arith.constant 0 : index
    %0 = vector.load %arg1[%c0, %c0_0] : memref<16x384xf32, #tpu.memory_space<vmem>>, vector<16x384xf32>
    %1 = arith.truncf %0 : vector<16x384xf32> to vector<16x384xbf16>
    %c0_1 = arith.constant 0 : index
    %c0_2 = arith.constant 0 : index
    %2 = vector.load %arg2[%c0_1, %c0_2] : memref<384x512xbf16, #tpu.memory_space<vmem>>, vector<384x512xbf16>
    %cst = arith.constant dense<0.000000e+00> : vector<16x512xf32>
    %3 = tpu.matmul %1, %2, %cst {dimension_numbers = #tpu.dot_dimension_numbers<[1], [0], [0], [1], [0, 0, 1, 1], [], []>} : vector<16x384xbf16>, vector<384x512xbf16>, vector<16x512xf32> -> vector<16x512xf32>
    %c0_3 = arith.constant 0 : index
    %c0_4 = arith.constant 0 : index
    %4 = vector.load %arg3[%c0_3, %c0_4] : memref<1x512xf32, #tpu.memory_space<vmem>>, vector<1x512xf32>
    %5 = vector.broadcast %4 : vector<1x512xf32> to vector<16x512xf32>
    %6 = arith.addf %3, %5 : vector<16x512xf32>
    %cst_5 = arith.constant 0.000000e+00 : f32
    %7 = vector.broadcast %cst_5 : f32 to vector<16x512xf32>
    %8 = arith.maximumf %6, %7 : vector<16x512xf32>
    %9 = arith.truncf %8 : vector<16x512xf32> to vector<16x512xbf16>
    %c0_6 = arith.constant 0 : index
    %c0_7 = arith.constant 0 : index
    %10 = vector.load %arg4[%c0_6, %c0_7] : memref<512x256xbf16, #tpu.memory_space<vmem>>, vector<512x256xbf16>
    %cst_8 = arith.constant dense<0.000000e+00> : vector<16x256xf32>
    %11 = tpu.matmul %9, %10, %cst_8 {dimension_numbers = #tpu.dot_dimension_numbers<[1], [0], [0], [1], [0, 0, 1, 1], [], []>} : vector<16x512xbf16>, vector<512x256xbf16>, vector<16x256xf32> -> vector<16x256xf32>
    %c0_9 = arith.constant 0 : index
    %c0_10 = arith.constant 0 : index
    %12 = vector.load %arg5[%c0_9, %c0_10] : memref<1x256xf32, #tpu.memory_space<vmem>>, vector<1x256xf32>
    %13 = vector.broadcast %12 : vector<1x256xf32> to vector<16x256xf32>
    %14 = arith.addf %11, %13 : vector<16x256xf32>
    %cst_11 = arith.constant 0.000000e+00 : f32
    %15 = vector.broadcast %cst_11 : f32 to vector<16x256xf32>
    %16 = arith.maximumf %14, %15 : vector<16x256xf32>
    %17 = arith.truncf %16 : vector<16x256xf32> to vector<16x256xbf16>
    %c0_12 = arith.constant 0 : index
    %c0_13 = arith.constant 0 : index
    %18 = vector.load %arg6[%c0_12, %c0_13] : memref<256x128xbf16, #tpu.memory_space<vmem>>, vector<256x128xbf16>
    %cst_14 = arith.constant dense<0.000000e+00> : vector<16x128xf32>
    %19 = tpu.matmul %17, %18, %cst_14 {dimension_numbers = #tpu.dot_dimension_numbers<[1], [0], [0], [1], [0, 0, 1, 1], [], []>} : vector<16x256xbf16>, vector<256x128xbf16>, vector<16x128xf32> -> vector<16x128xf32>
    %c0_15 = arith.constant 0 : index
    %c0_16 = arith.constant 0 : index
    %20 = vector.load %arg7[%c0_15, %c0_16] : memref<1x128xf32, #tpu.memory_space<vmem>>, vector<1x128xf32>
    %21 = vector.broadcast %20 : vector<1x128xf32> to vector<16x128xf32>
    %22 = arith.addf %19, %21 : vector<16x128xf32>
    %cst_17 = arith.constant 0.000000e+00 : f32
    %23 = vector.broadcast %cst_17 : f32 to vector<16x128xf32>
    %24 = arith.maximumf %22, %23 : vector<16x128xf32>
    %25 = arith.truncf %24 : vector<16x128xf32> to vector<16x128xbf16>
    %c0_18 = arith.constant 0 : index
    %c0_19 = arith.constant 0 : index
    %26 = vector.load %arg8[%c0_18, %c0_19] : memref<128x128xbf16, #tpu.memory_space<vmem>>, vector<128x128xbf16>
    %cst_20 = arith.constant dense<0.000000e+00> : vector<16x128xf32>
    %27 = tpu.matmul %25, %26, %cst_20 {dimension_numbers = #tpu.dot_dimension_numbers<[1], [0], [0], [1], [0, 0, 1, 1], [], []>} : vector<16x128xbf16>, vector<128x128xbf16>, vector<16x128xf32> -> vector<16x128xf32>
    %c0_21 = arith.constant 0 : index
    %c0_22 = arith.constant 0 : index
    %28 = vector.load %arg9[%c0_21, %c0_22] : memref<1x128xf32, #tpu.memory_space<vmem>>, vector<1x128xf32>
    %29 = vector.broadcast %28 : vector<1x128xf32> to vector<16x128xf32>
    %30 = arith.addf %27, %29 : vector<16x128xf32>
    %c0_23 = arith.constant 0 : index
    %c0_24 = arith.constant 0 : index
    %31 = vector.load %arg10[%c0_23, %c0_24] : memref<16x128xf32, #tpu.memory_space<vmem>>, vector<16x128xf32>
    tpu.vector_store %arg10[%c0_23, %c0_24], %30 {strides = array<i32>} : memref<16x128xf32, #tpu.memory_space<vmem>>, vector<16x128xf32>,
    return
  }
  func.func @transform_0(%arg0: i32) -> (i32, i32) {
    %c0_i32 = arith.constant 0 : i32
    %c0_i32_0 = arith.constant 0 : i32
    return %arg0, %c0_i32 : i32, i32
  }
  func.func @transform_1(%arg0: i32) -> (i32, i32) {
    %c0_i32 = arith.constant 0 : i32
    %c0_i32_0 = arith.constant 0 : i32
    %c0_i32_1 = arith.constant 0 : i32
    return %c0_i32, %c0_i32_0 : i32, i32
  }
  func.func @transform_2(%arg0: i32) -> (i32, i32) {
    %c0_i32 = arith.constant 0 : i32
    %c0_i32_0 = arith.constant 0 : i32
    %c0_i32_1 = arith.constant 0 : i32
    return %c0_i32, %c0_i32_0 : i32, i32
  }
  func.func @transform_3(%arg0: i32) -> (i32, i32) {
    %c0_i32 = arith.constant 0 : i32
    %c0_i32_0 = arith.constant 0 : i32
    %c0_i32_1 = arith.constant 0 : i32
    return %c0_i32, %c0_i32_0 : i32, i32
  }
  func.func @transform_4(%arg0: i32) -> (i32, i32) {
    %c0_i32 = arith.constant 0 : i32
    %c0_i32_0 = arith.constant 0 : i32
    %c0_i32_1 = arith.constant 0 : i32
    return %c0_i32, %c0_i32_0 : i32, i32
  }
  func.func @transform_5(%arg0: i32) -> (i32, i32) {
    %c0_i32 = arith.constant 0 : i32
    %c0_i32_0 = arith.constant 0 : i32
    %c0_i32_1 = arith.constant 0 : i32
    return %c0_i32, %c0_i32_0 : i32, i32
  }
  func.func @transform_6(%arg0: i32) -> (i32, i32) {
    %c0_i32 = arith.constant 0 : i32
    %c0_i32_0 = arith.constant 0 : i32
    %c0_i32_1 = arith.constant 0 : i32
    return %c0_i32, %c0_i32_0 : i32, i32
  }
  func.func @transform_7(%arg0: i32) -> (i32, i32) {
    %c0_i32 = arith.constant 0 : i32
    %c0_i32_0 = arith.constant 0 : i32
    %c0_i32_1 = arith.constant 0 : i32
    return %c0_i32, %c0_i32_0 : i32, i32
  }
  func.func @transform_8(%arg0: i32) -> (i32, i32) {
    %c0_i32 = arith.constant 0 : i32
    %c0_i32_0 = arith.constant 0 : i32
    %c0_i32_1 = arith.constant 0 : i32
    return %c0_i32, %c0_i32_0 : i32, i32
  }
  func.func @transform_9(%arg0: i32) -> (i32, i32) {
    %c0_i32 = arith.constant 0 : i32
    %c0_i32_0 = arith.constant 0 : i32
    return %arg0, %c0_i32 : i32, i32
  }
}

</mosaic_0001>

<llo_original>
// kernel: mlp_classifier_forward.1
$region0: #{mlp_classifier_forward.1}
  #allocation0 [shape = 'u32[]', space=smem, size = 0x4, offset = 0x4, fixed_abs, tag = 'smem constant byte address 0x4 - core index']
  #allocation1 [shape = 'u32[144,128]{1,0:T(1,128)}', space=vmem, size = 0x12000, scoped, tag = 'internal scratch']
  %s0 = inlined_call_operand.vmem [shape: f32[16,384], index: 0, kind: input, shape index: {}]
  %s1 = inlined_call_operand.hbm [shape: bf16[384,512], index: 1, kind: input, shape index: {}]
  %s2 = inlined_call_operand.vmem [shape: f32[1,512], index: 2, kind: input, shape index: {}]
  %s3 = inlined_call_operand.hbm [shape: bf16[512,256], index: 3, kind: input, shape index: {}]
  %s4 = inlined_call_operand.vmem [shape: f32[1,256], index: 4, kind: input, shape index: {}]
  %s5 = inlined_call_operand.vmem [shape: bf16[256,128], index: 5, kind: input, shape index: {}]
  %s6 = inlined_call_operand.vmem [shape: f32[1,128], index: 6, kind: input, shape index: {}]
  %s7 = inlined_call_operand.vmem [shape: bf16[128,128], index: 7, kind: input, shape index: {}]
  %s8 = inlined_call_operand.vmem [shape: f32[1,128], index: 8, kind: input, shape index: {}]
  %s9 = inlined_call_operand.vmem [shape: f32[16,128], index: 9, kind: output, shape index: {}]
  %s10 = sld [smem:[#allocation0]]
  $region54: #{mlp_classifier_forward.1} parent=0
    _
  %s12 = ssub.s32 1, %s10
  %s13 = scalar_select 0, %s12, %s10
  $region1: #{mlp_classifier_forward.1} parent=0
    #allocation2 [shape = 'u8[393216]{0}', space=vmem, size = 0x60000, scoped, tag = 'input window, operand 1, single buffered']
    #allocation3 [shape = 's32[1]{0}', space=sflag, size = 0x4, scoped, tag = 'scoped memory for mlp_classifier_forward.1']
    #allocation4 [shape = 'u8[262144]{0}', space=vmem, size = 0x40000, scoped, tag = 'input window, operand 3, single buffered']
    #allocation5 [shape = 's32[1]{0}', space=sflag, size = 0x4, scoped, tag = 'scoped memory for mlp_classifier_forward.1']
    %14 = vsyncpa [#allocation3], 0
    %15 = vsyncpa [#allocation5], 0
    // Predicated region
    $region2: #{mlp_classifier_forward.1} parent=1 // pred_check
      _
    $region3: #{mlp_classifier_forward.1} parent=1 // pred_check_branch
      %17 = sbr.rel (0) target = $region5
    $region4: #{mlp_classifier_forward.1} parent=1 // pred_region
      _
    $region5: #{mlp_classifier_forward.1} parent=1 // pred_fallthru
      _
    // Predicated region
    $region6: #{mlp_classifier_forward.1} parent=1 // pred_check
      _
    $region7: #{mlp_classifier_forward.1} parent=1 // pred_check_branch
      %19 = sbr.rel (0) target = $region9
    $region8: #{mlp_classifier_forward.1} parent=1 // pred_region
      %s21 = ssub.s32 12288, 12288
      %22 = vsyncadd [#allocation3], %s21
      %s23 = sshll.u32 [#allocation2], 4
      %s24 = int_to_ptr.vmem [resolvable:$true] %s23
      %29 = dma.hbm_to_vmem [thread:$0]  %s1, 12288, %s24, [#allocation3], 256, 256, 16
    $region9: #{mlp_classifier_forward.1} parent=1 // pred_fallthru
      _
    // Predicated region
    $region10: #{mlp_classifier_forward.1} parent=1 // pred_check
      _
    $region11: #{mlp_classifier_forward.1} parent=1 // pred_check_branch
      %31 = sbr.rel (0) target = $region13
    $region12: #{mlp_classifier_forward.1} parent=1 // pred_region
      _
    $region13: #{mlp_classifier_forward.1} parent=1 // pred_fallthru
      _
    // Predicated region
    $region14: #{mlp_classifier_forward.1} parent=1 // pred_check
      _
    $region15: #{mlp_classifier_forward.1} parent=1 // pred_check_branch
      %33 = sbr.rel (0) target = $region17
    $region16: #{mlp_classifier_forward.1} parent=1 // pred_region
      %s35 = ssub.s32 8192, 8192
      %36 = vsyncadd [#allocation5], %s35
      %s37 = sshll.u32 [#allocation4], 4
      %s38 = int_to_ptr.vmem [resolvable:$true] %s37
      %43 = dma.hbm_to_vmem [thread:$0]  %s3, 8192, %s38, [#allocation5], 128, 128, 8
    $region17: #{mlp_classifier_forward.1} parent=1 // pred_fallthru
      _
    // Predicated region
    $region18: #{mlp_classifier_forward.1} parent=1 // pred_check
      _
    $region19: #{mlp_classifier_forward.1} parent=1 // pred_check_branch
      %45 = sbr.rel (0) target = $region21
    $region20: #{mlp_classifier_forward.1} parent=1 // pred_region
      _
    $region21: #{mlp_classifier_forward.1} parent=1 // pred_fallthru
      _
    // Predicated region
    $region22: #{mlp_classifier_forward.1} parent=1 // pred_check
      _
    $region23: #{mlp_classifier_forward.1} parent=1 // pred_check_branch
      %47 = sbr.rel (0) target = $region25
    $region24: #{mlp_classifier_forward.1} parent=1 // pred_region
      _
    $region25: #{mlp_classifier_forward.1} parent=1 // pred_fallthru
      _
    // Predicated region
    $region26: #{mlp_classifier_forward.1} parent=1 // pred_check
      _
    $region27: #{mlp_classifier_forward.1} parent=1 // pred_check_branch
      %49 = sbr.rel (0) target = $region29
    $region28: #{mlp_classifier_forward.1} parent=1 // pred_region
      _
    $region29: #{mlp_classifier_forward.1} parent=1 // pred_fallthru
      _
    // Predicated region
    $region30: #{mlp_classifier_forward.1} parent=1 // pred_check
      _
    $region31: #{mlp_classifier_forward.1} parent=1 // pred_check_branch
      %51 = sbr.rel (0) target = $region33
    $region32: #{mlp_classifier_forward.1} parent=1 // pred_region
      _
    $region33: #{mlp_classifier_forward.1} parent=1 // pred_fallthru
      _
    // Predicated region
    $region34: #{mlp_classifier_forward.1} parent=1 // pred_check
      _
    $region35: #{mlp_classifier_forward.1} parent=1 // pred_check_branch
      %53 = sbr.rel (0) target = $region37
    $region36: #{mlp_classifier_forward.1} parent=1 // pred_region
      _
    $region37: #{mlp_classifier_forward.1} parent=1 // pred_fallthru
      _
    // Predicated region
    $region38: #{mlp_classifier_forward.1} parent=1 // pred_check
      _
    $region39: #{mlp_classifier_forward.1} parent=1 // pred_check_branch
      %55 = sbr.rel (0) target = $region41
    $region40: #{mlp_classifier_forward.1} parent=1 // pred_region
      %56 = dma.done [#allocation3], 12288
    $region41: #{mlp_classifier_forward.1} parent=1 // pred_fallthru
      _
    // Predicated region
    $region42: #{mlp_classifier_forward.1} parent=1 // pred_check
      _
    $region43: #{mlp_classifier_forward.1} parent=1 // pred_check_branch
      %58 = sbr.rel (0) target = $region45
    $region44: #{mlp_classifier_forward.1} parent=1 // pred_region
      %59 = dma.done [#allocation5], 8192
    $region45: #{mlp_classifier_forward.1} parent=1 // pred_fallthru
      _
    %v61 = vld [vmem:[%s0] sm:$0xff]
    %v62 = vld [vmem:[%s0 + $0x8] sm:$0xff]
    %v63 = vld [vmem:[%s0 + $0x10] sm:$0xff]
    %v64 = vld [vmem:[%s0 + $0x18] sm:$0xff]
    %v65 = vld [vmem:[%s0 + $0x20] sm:$0xff]
    %v66 = vld [vmem:[%s0 + $0x28] sm:$0xff]
    %v67 = vpack.c.bf16 %v64, %v61
    %v68 = vpack.c.bf16 %v65, %v62
    %v69 = vpack.c.bf16 %v66, %v63
    %v70 = vld [vmem:[#allocation2] sm:$0xff]
    %v71 = vld [vmem:[#allocation2 + $0x8] sm:$0xff]
    %v72 = vld [vmem:[#allocation2 + $0x10] sm:$0xff]
    %v73 = vld [vmem:[#allocation2 + $0x18] sm:$0xff]
    %v74 = vld [vmem:[#allocation2 + $0x20] sm:$0xff]
    %v75 = vld [vmem:[#allocation2 + $0x28] sm:$0xff]
    %v76 = vld [vmem:[#allocation2 + $0x30] sm:$0xff]
    %v77 = vld [vmem:[#allocation2 + $0x38] sm:$0xff]
    %v78 = vld [vmem:[#allocation2 + $0x40] sm:$0xff]
    %v79 = vld [vmem:[#allocation2 + $0x48] sm:$0xff]
    %v80 = vld [vmem:[#allocation2 + $0x50] sm:$0xff]
    %v81 = vld [vmem:[#allocation2 + $0x58] sm:$0xff]
    %v82 = vld [vmem:[#allocation2 + $0x60] sm:$0xff]
    %v83 = vld [vmem:[#allocation2 + $0x68] sm:$0xff]
    %v84 = vld [vmem:[#allocation2 + $0x70] sm:$0xff]
    %v85 = vld [vmem:[#allocation2 + $0x78] sm:$0xff]
    %v86 = vld [vmem:[#allocation2 + $0x80] sm:$0xff]
    %v87 = vld [vmem:[#allocation2 + $0x88] sm:$0xff]
    %v88 = vld [vmem:[#allocation2 + $0x90] sm:$0xff]
    %v89 = vld [vmem:[#allocation2 + $0x98] sm:$0xff]
    %v90 = vld [vmem:[#allocation2 + $0xa0] sm:$0xff]
    %v91 = vld [vmem:[#allocation2 + $0xa8] sm:$0xff]
    %v92 = vld [vmem:[#allocation2 + $0xb0] sm:$0xff]
    %v93 = vld [vmem:[#allocation2 + $0xb8] sm:$0xff]
    %v94 = vld [vmem:[#allocation2 + $0xc0] sm:$0xff]
    %v95 = vld [vmem:[#allocation2 + $0xc8] sm:$0xff]
    %v96 = vld [vmem:[#allocation2 + $0xd0] sm:$0xff]
    %v97 = vld [vmem:[#allocation2 + $0xd8] sm:$0xff]
    %v98 = vld [vmem:[#allocation2 + $0xe0] sm:$0xff]
    %v99 = vld [vmem:[#allocation2 + $0xe8] sm:$0xff]
    %v100 = vld [vmem:[#allocation2 + $0xf0] sm:$0xff]
    %v101 = vld [vmem:[#allocation2 + $0xf8] sm:$0xff]
    %v102 = vld [vmem:[#allocation2 + $0x100] sm:$0xff]
    %v103 = vld [vmem:[#allocation2 + $0x108] sm:$0xff]
    %v104 = vld [vmem:[#allocation2 + $0x110] sm:$0xff]
    %v105 = vld [vmem:[#allocation2 + $0x118] sm:$0xff]
    %v106 = vld [vmem:[#allocation2 + $0x120] sm:$0xff]
    %v107 = vld [vmem:[#allocation2 + $0x128] sm:$0xff]
    %v108 = vld [vmem:[#allocation2 + $0x130] sm:$0xff]
    %v109 = vld [vmem:[#allocation2 + $0x138] sm:$0xff]
    %v110 = vld [vmem:[#allocation2 + $0x140] sm:$0xff]
    %v111 = vld [vmem:[#allocation2 + $0x148] sm:$0xff]
    %v112 = vld [vmem:[#allocation2 + $0x150] sm:$0xff]
    %v113 = vld [vmem:[#allocation2 + $0x158] sm:$0xff]
    %v114 = vld [vmem:[#allocation2 + $0x160] sm:$0xff]
    %v115 = vld [vmem:[#allocation2 + $0x168] sm:$0xff]
    %v116 = vld [vmem:[#allocation2 + $0x170] sm:$0xff]
    %v117 = vld [vmem:[#allocation2 + $0x178] sm:$0xff]
    %v118 = vld [vmem:[#allocation2 + $0x180] sm:$0xff]
    %v119 = vld [vmem:[#allocation2 + $0x188] sm:$0xff]
    %v120 = vld [vmem:[#allocation2 + $0x190] sm:$0xff]
    %v121 = vld [vmem:[#allocation2 + $0x198] sm:$0xff]
    %v122 = vld [vmem:[#allocation2 + $0x1a0] sm:$0xff]
    %v123 = vld [vmem:[#allocation2 + $0x1a8] sm:$0xff]
    %v124 = vld [vmem:[#allocation2 + $0x1b0] sm:$0xff]
    %v125 = vld [vmem:[#allocation2 + $0x1b8] sm:$0xff]
    %v126 = vld [vmem:[#allocation2 + $0x1c0] sm:$0xff]
    %v127 = vld [vmem:[#allocation2 + $0x1c8] sm:$0xff]
    %v128 = vld [vmem:[#allocation2 + $0x1d0] sm:$0xff]
    %v129 = vld [vmem:[#allocation2 + $0x1d8] sm:$0xff]
    %v130 = vld [vmem:[#allocation2 + $0x1e0] sm:$0xff]
    %v131 = vld [vmem:[#allocation2 + $0x1e8] sm:$0xff]
    %v132 = vld [vmem:[#allocation2 + $0x1f0] sm:$0xff]
    %v133 = vld [vmem:[#allocation2 + $0x1f8] sm:$0xff]
    %v134 = vld [vmem:[#allocation2 + $0x200] sm:$0xff]
    %v135 = vld [vmem:[#allocation2 + $0x208] sm:$0xff]
    %v136 = vld [vmem:[#allocation2 + $0x210] sm:$0xff]
    %v137 = vld [vmem:[#allocation2 + $0x218] sm:$0xff]
    %v138 = vld [vmem:[#allocation2 + $0x220] sm:$0xff]
    %v139 = vld [vmem:[#allocation2 + $0x228] sm:$0xff]
    %v140 = vld [vmem:[#allocation2 + $0x230] sm:$0xff]
    %v141 = vld [vmem:[#allocation2 + $0x238] sm:$0xff]
    %v142 = vld [vmem:[#allocation2 + $0x240] sm:$0xff]
    %v143 = vld [vmem:[#allocation2 + $0x248] sm:$0xff]
    %v144 = vld [vmem:[#allocation2 + $0x250] sm:$0xff]
    %v145 = vld [vmem:[#allocation2 + $0x258] sm:$0xff]
    %v146 = vld [vmem:[#allocation2 + $0x260] sm:$0xff]
    %v147 = vld [vmem:[#allocation2 + $0x268] sm:$0xff]
    %v148 = vld [vmem:[#allocation2 + $0x270] sm:$0xff]
    %v149 = vld [vmem:[#allocation2 + $0x278] sm:$0xff]
    %v150 = vld [vmem:[#allocation2 + $0x280] sm:$0xff]
    %v151 = vld [vmem:[#allocation2 + $0x288] sm:$0xff]
    %v152 = vld [vmem:[#allocation2 + $0x290] sm:$0xff]
    %v153 = vld [vmem:[#allocation2 + $0x298] sm:$0xff]
    %v154 = vld [vmem:[#allocation2 + $0x2a0] sm:$0xff]
    %v155 = vld [vmem:[#allocation2 + $0x2a8] sm:$0xff]
    %v156 = vld [vmem:[#allocation2 + $0x2b0] sm:$0xff]
    %v157 = vld [vmem:[#allocation2 + $0x2b8] sm:$0xff]
    %v158 = vld [vmem:[#allocation2 + $0x2c0] sm:$0xff]
    %v159 = vld [vmem:[#allocation2 + $0x2c8] sm:$0xff]
    %v160 = vld [vmem:[#allocation2 + $0x2d0] sm:$0xff]
    %v161 = vld [vmem:[#allocation2 + $0x2d8] sm:$0xff]
    %v162 = vld [vmem:[#allocation2 + $0x2e0] sm:$0xff]
    %v163 = vld [vmem:[#allocation2 + $0x2e8] sm:$0xff]
    %v164 = vld [vmem:[#allocation2 + $0x2f0] sm:$0xff]
    %v165 = vld [vmem:[#allocation2 + $0x2f8] sm:$0xff]
    %v166 = vld [vmem:[%s2] sm:$0xf]
    %v168 = vlaneseq
    %v169 = vshrl.u32 %v168, 7
    %v170 = vsub.s32 0, %v169
    %v171 = vrot.slane %v166, %v170
    %v172 = vlaneseq
    %v173 = vshrl.u32 %v172, 7
    %v174 = vsub.s32 1, %v173
    %v175 = vrot.slane %v166, %v174
    %v176 = vlaneseq
    %v177 = vshrl.u32 %v176, 7
    %v178 = vsub.s32 2, %v177
    %v179 = vrot.slane %v166, %v178
    %v180 = vlaneseq
    %v181 = vshrl.u32 %v180, 7
    %v182 = vsub.s32 3, %v181
    %v183 = vrot.slane %v166, %v182
    %v284 = vunpack.c.l.b16 %v70
    %v285 = vunpack.c.h.b16 %v70
    %v286 = vunpack.c.l.b16 %v71
    %v287 = vunpack.c.h.b16 %v71
    %v288 = vunpack.c.l.b16 %v72
    %v289 = vunpack.c.h.b16 %v72
    %v290 = vunpack.c.l.b16 %v73
    %v291 = vunpack.c.h.b16 %v73
    %v292 = vunpack.c.l.b16 %v74
    %v293 = vunpack.c.h.b16 %v74
    %v294 = vunpack.c.l.b16 %v75
    %v295 = vunpack.c.h.b16 %v75
    %v296 = vunpack.c.l.b16 %v76
    %v297 = vunpack.c.h.b16 %v76
    %v298 = vunpack.c.l.b16 %v77
    %v299 = vunpack.c.h.b16 %v77
    %v300 = vunpack.c.l.b16 %v78
    %v301 = vunpack.c.h.b16 %v78
    %v302 = vunpack.c.l.b16 %v79
    %v303 = vunpack.c.h.b16 %v79
    %v304 = vunpack.c.l.b16 %v80
    %v305 = vunpack.c.h.b16 %v80
    %v306 = vunpack.c.l.b16 %v81
    %v307 = vunpack.c.h.b16 %v81
    %v308 = vunpack.c.l.b16 %v82
    %v309 = vunpack.c.h.b16 %v82
    %v310 = vunpack.c.l.b16 %v83
    %v311 = vunpack.c.h.b16 %v83
    %v312 = vunpack.c.l.b16 %v84
    %v313 = vunpack.c.h.b16 %v84
    %v314 = vunpack.c.l.b16 %v85
    %v315 = vunpack.c.h.b16 %v85
    %v316 = vunpack.c.l.b16 %v86
    %v317 = vunpack.c.h.b16 %v86
    %v318 = vunpack.c.l.b16 %v87
    %v319 = vunpack.c.h.b16 %v87
    %v320 = vunpack.c.l.b16 %v88
    %v321 = vunpack.c.h.b16 %v88
    %v322 = vunpack.c.l.b16 %v89
    %v323 = vunpack.c.h.b16 %v89
    %v324 = vunpack.c.l.b16 %v90
    %v325 = vunpack.c.h.b16 %v90
    %v326 = vunpack.c.l.b16 %v91
    %v327 = vunpack.c.h.b16 %v91
    %v328 = vunpack.c.l.b16 %v92
    %v329 = vunpack.c.h.b16 %v92
    %v330 = vunpack.c.l.b16 %v93
    %v331 = vunpack.c.h.b16 %v93
    %v332 = vunpack.c.l.b16 %v94
    %v333 = vunpack.c.h.b16 %v94
    %v334 = vunpack.c.l.b16 %v95
    %v335 = vunpack.c.h.b16 %v95
    %v336 = vunpack.c.l.b16 %v96
    %v337 = vunpack.c.h.b16 %v96
    %v338 = vunpack.c.l.b16 %v97
    %v339 = vunpack.c.h.b16 %v97
    %v340 = vunpack.c.l.b16 %v98
    %v341 = vunpack.c.h.b16 %v98
    %v342 = vunpack.c.l.b16 %v99
    %v343 = vunpack.c.h.b16 %v99
    %v344 = vunpack.c.l.b16 %v100
    %v345 = vunpack.c.h.b16 %v100
    %v346 = vunpack.c.l.b16 %v101
    %v347 = vunpack.c.h.b16 %v101
    %v348 = vunpack.c.l.b16 %v102
    %v349 = vunpack.c.h.b16 %v102
    %v350 = vunpack.c.l.b16 %v103
    %v351 = vunpack.c.h.b16 %v103
    %v352 = vunpack.c.l.b16 %v104
    %v353 = vunpack.c.h.b16 %v104
    %v354 = vunpack.c.l.b16 %v105
    %v355 = vunpack.c.h.b16 %v105
    %v356 = vunpack.c.l.b16 %v106
    %v357 = vunpack.c.h.b16 %v106
    %v358 = vunpack.c.l.b16 %v107
    %v359 = vunpack.c.h.b16 %v107
    %v360 = vunpack.c.l.b16 %v108
    %v361 = vunpack.c.h.b16 %v108
    %v362 = vunpack.c.l.b16 %v109
    %v363 = vunpack.c.h.b16 %v109
    %v364 = vunpack.c.l.b16 %v110
    %v365 = vunpack.c.h.b16 %v110
    %v366 = vunpack.c.l.b16 %v111
    %v367 = vunpack.c.h.b16 %v111
    %v368 = vunpack.c.l.b16 %v112
    %v369 = vunpack.c.h.b16 %v112
    %v370 = vunpack.c.l.b16 %v113
    %v371 = vunpack.c.h.b16 %v113
    %v372 = vunpack.c.l.b16 %v114
    %v373 = vunpack.c.h.b16 %v114
    %v374 = vunpack.c.l.b16 %v115
    %v375 = vunpack.c.h.b16 %v115
    %v376 = vunpack.c.l.b16 %v116
    %v377 = vunpack.c.h.b16 %v116
    %v378 = vunpack.c.l.b16 %v117
    %v379 = vunpack.c.h.b16 %v117
    %v380 = vunpack.c.l.b16 %v118
    %v381 = vunpack.c.h.b16 %v118
    %v382 = vunpack.c.l.b16 %v119
    %v383 = vunpack.c.h.b16 %v119
    %v384 = vunpack.c.l.b16 %v120
    %v385 = vunpack.c.h.b16 %v120
    %v386 = vunpack.c.l.b16 %v121
    %v387 = vunpack.c.h.b16 %v121
    %v388 = vunpack.c.l.b16 %v122
    %v389 = vunpack.c.h.b16 %v122
    %v390 = vunpack.c.l.b16 %v123
    %v391 = vunpack.c.h.b16 %v123
    %v392 = vunpack.c.l.b16 %v124
    %v393 = vunpack.c.h.b16 %v124
    %v394 = vunpack.c.l.b16 %v125
    %v395 = vunpack.c.h.b16 %v125
    %v396 = vunpack.c.l.b16 %v126
    %v397 = vunpack.c.h.b16 %v126
    %v398 = vunpack.c.l.b16 %v127
    %v399 = vunpack.c.h.b16 %v127
    %v400 = vunpack.c.l.b16 %v128
    %v401 = vunpack.c.h.b16 %v128
    %v402 = vunpack.c.l.b16 %v129
    %v403 = vunpack.c.h.b16 %v129
    %v404 = vunpack.c.l.b16 %v130
    %v405 = vunpack.c.h.b16 %v130
    %v406 = vunpack.c.l.b16 %v131
    %v407 = vunpack.c.h.b16 %v131
    %v408 = vunpack.c.l.b16 %v132
    %v409 = vunpack.c.h.b16 %v132
    %v410 = vunpack.c.l.b16 %v133
    %v411 = vunpack.c.h.b16 %v133
    %v412 = vunpack.c.l.b16 %v134
    %v413 = vunpack.c.h.b16 %v134
    %v414 = vunpack.c.l.b16 %v135
    %v415 = vunpack.c.h.b16 %v135
    %v416 = vunpack.c.l.b16 %v136
    %v417 = vunpack.c.h.b16 %v136
    %v418 = vunpack.c.l.b16 %v137
    %v419 = vunpack.c.h.b16 %v137
    %v420 = vunpack.c.l.b16 %v138
    %v421 = vunpack.c.h.b16 %v138
    %v422 = vunpack.c.l.b16 %v139
    %v423 = vunpack.c.h.b16 %v139
    %v424 = vunpack.c.l.b16 %v140
    %v425 = vunpack.c.h.b16 %v140
    %v426 = vunpack.c.l.b16 %v141
    %v427 = vunpack.c.h.b16 %v141
    %v428 = vunpack.c.l.b16 %v142
    %v429 = vunpack.c.h.b16 %v142
    %v430 = vunpack.c.l.b16 %v143
    %v431 = vunpack.c.h.b16 %v143
    %v432 = vunpack.c.l.b16 %v144
    %v433 = vunpack.c.h.b16 %v144
    %v434 = vunpack.c.l.b16 %v145
    %v435 = vunpack.c.h.b16 %v145
    %v436 = vunpack.c.l.b16 %v146
    %v437 = vunpack.c.h.b16 %v146
    %v438 = vunpack.c.l.b16 %v147
    %v439 = vunpack.c.h.b16 %v147
    %v440 = vunpack.c.l.b16 %v148
    %v441 = vunpack.c.h.b16 %v148
    %v442 = vunpack.c.l.b16 %v149
    %v443 = vunpack.c.h.b16 %v149
    %v444 = vunpack.c.l.b16 %v150
    %v445 = vunpack.c.h.b16 %v150
    %v446 = vunpack.c.l.b16 %v151
    %v447 = vunpack.c.h.b16 %v151
    %v448 = vunpack.c.l.b16 %v152
    %v449 = vunpack.c.h.b16 %v152
    %v450 = vunpack.c.l.b16 %v153
    %v451 = vunpack.c.h.b16 %v153
    %v452 = vunpack.c.l.b16 %v154
    %v453 = vunpack.c.h.b16 %v154
    %v454 = vunpack.c.l.b16 %v155
    %v455 = vunpack.c.h.b16 %v155
    %v456 = vunpack.c.l.b16 %v156
    %v457 = vunpack.c.h.b16 %v156
    %v458 = vunpack.c.l.b16 %v157
    %v459 = vunpack.c.h.b16 %v157
    %v460 = vunpack.c.l.b16 %v158
    %v461 = vunpack.c.h.b16 %v158
    %v462 = vunpack.c.l.b16 %v159
    %v463 = vunpack.c.h.b16 %v159
    %v464 = vunpack.c.l.b16 %v160
    %v465 = vunpack.c.h.b16 %v160
    %v466 = vunpack.c.l.b16 %v161
    %v467 = vunpack.c.h.b16 %v161
    %v468 = vunpack.c.l.b16 %v162
    %v469 = vunpack.c.h.b16 %v162
    %v470 = vunpack.c.l.b16 %v163
    %v471 = vunpack.c.h.b16 %v163
    %v472 = vunpack.c.l.b16 %v164
    %v473 = vunpack.c.h.b16 %v164
    %v474 = vunpack.c.l.b16 %v165
    %v475 = vunpack.c.h.b16 %v165
    %v476 = vpack.c.b16 %v288, %v284
    %v477 = vpack.c.b16 %v289, %v285
    %v478 = vpack.c.b16 %v290, %v286
    %v479 = vpack.c.b16 %v291, %v287
    %v480 = vpack.c.b16 %v296, %v292
    %v481 = vpack.c.b16 %v297, %v293
    %v482 = vpack.c.b16 %v298, %v294
    %v483 = vpack.c.b16 %v299, %v295
    %v484 = vpack.c.b16 %v304, %v300
    %v485 = vpack.c.b16 %v305, %v301
    %v486 = vpack.c.b16 %v306, %v302
    %v487 = vpack.c.b16 %v307, %v303
    %v488 = vpack.c.b16 %v312, %v308
    %v489 = vpack.c.b16 %v313, %v309
    %v490 = vpack.c.b16 %v314, %v310
    %v491 = vpack.c.b16 %v315, %v311
    %v492 = vpack.c.b16 %v320, %v316
    %v493 = vpack.c.b16 %v321, %v317
    %v494 = vpack.c.b16 %v322, %v318
    %v495 = vpack.c.b16 %v323, %v319
    %v496 = vpack.c.b16 %v328, %v324
    %v497 = vpack.c.b16 %v329, %v325
    %v498 = vpack.c.b16 %v330, %v326
    %v499 = vpack.c.b16 %v331, %v327
    %v500 = vpack.c.b16 %v336, %v332
    %v501 = vpack.c.b16 %v337, %v333
    %v502 = vpack.c.b16 %v338, %v334
    %v503 = vpack.c.b16 %v339, %v335
    %v504 = vpack.c.b16 %v344, %v340
    %v505 = vpack.c.b16 %v345, %v341
    %v506 = vpack.c.b16 %v346, %v342
    %v507 = vpack.c.b16 %v347, %v343
    %v508 = vpack.c.b16 %v352, %v348
    %v509 = vpack.c.b16 %v353, %v349
    %v510 = vpack.c.b16 %v354, %v350
    %v511 = vpack.c.b16 %v355, %v351
    %v512 = vpack.c.b16 %v360, %v356
    %v513 = vpack.c.b16 %v361, %v357
    %v514 = vpack.c.b16 %v362, %v358
    %v515 = vpack.c.b16 %v363, %v359
    %v516 = vpack.c.b16 %v368, %v364
    %v517 = vpack.c.b16 %v369, %v365
    %v518 = vpack.c.b16 %v370, %v366
    %v519 = vpack.c.b16 %v371, %v367
    %v520 = vpack.c.b16 %v376, %v372
    %v521 = vpack.c.b16 %v377, %v373
    %v522 = vpack.c.b16 %v378, %v374
    %v523 = vpack.c.b16 %v379, %v375
    %v524 = vpack.c.b16 %v384, %v380
    %v525 = vpack.c.b16 %v385, %v381
    %v526 = vpack.c.b16 %v386, %v382
    %v527 = vpack.c.b16 %v387, %v383
    %v528 = vpack.c.b16 %v392, %v388
    %v529 = vpack.c.b16 %v393, %v389
    %v530 = vpack.c.b16 %v394, %v390
    %v531 = vpack.c.b16 %v395, %v391
    %v532 = vpack.c.b16 %v400, %v396
    %v533 = vpack.c.b16 %v401, %v397
    %v534 = vpack.c.b16 %v402, %v398
    %v535 = vpack.c.b16 %v403, %v399
    %v536 = vpack.c.b16 %v408, %v404
    %v537 = vpack.c.b16 %v409, %v405
    %v538 = vpack.c.b16 %v410, %v406
    %v539 = vpack.c.b16 %v411, %v407
    %v540 = vpack.c.b16 %v416, %v412
    %v541 = vpack.c.b16 %v417, %v413
    %v542 = vpack.c.b16 %v418, %v414
    %v543 = vpack.c.b16 %v419, %v415
    %v544 = vpack.c.b16 %v424, %v420
    %v545 = vpack.c.b16 %v425, %v421
    %v546 = vpack.c.b16 %v426, %v422
    %v547 = vpack.c.b16 %v427, %v423
    %v548 = vpack.c.b16 %v432, %v428
    %v549 = vpack.c.b16 %v433, %v429
    %v550 = vpack.c.b16 %v434, %v430
    %v551 = vpack.c.b16 %v435, %v431
    %v552 = vpack.c.b16 %v440, %v436
    %v553 = vpack.c.b16 %v441, %v437
    %v554 = vpack.c.b16 %v442, %v438
    %v555 = vpack.c.b16 %v443, %v439
    %v556 = vpack.c.b16 %v448, %v444
    %v557 = vpack.c.b16 %v449, %v445
    %v558 = vpack.c.b16 %v450, %v446
    %v559 = vpack.c.b16 %v451, %v447
    %v560 = vpack.c.b16 %v456, %v452
    %v561 = vpack.c.b16 %v457, %v453
    %v562 = vpack.c.b16 %v458, %v454
    %v563 = vpack.c.b16 %v459, %v455
    %v564 = vpack.c.b16 %v464, %v460
    %v565 = vpack.c.b16 %v465, %v461
    %v566 = vpack.c.b16 %v466, %v462
    %v567 = vpack.c.b16 %v467, %v463
    %v568 = vpack.c.b16 %v472, %v468
    %v569 = vpack.c.b16 %v473, %v469
    %v570 = vpack.c.b16 %v474, %v470
    %v571 = vpack.c.b16 %v475, %v471
    %668 = vmatprep.subr.bf16.mxu0 %v477
    %669 = vmatpush1.bf16.msra.mxu0 %v476
    %670 = vmatprep.subr.bf16.mxu0 %v481
    %671 = vmatpush1.bf16.msra.mxu0 %v480
    %672 = vmatprep.subr.bf16.mxu0 %v485
    %673 = vmatpush1.bf16.msra.mxu0 %v484
    %674 = vmatprep.subr.bf16.mxu0 %v489
    %675 = vmatpush1.bf16.msra.mxu0 %v488
    %676 = vmatprep.subr.bf16.mxu0 %v493
    %677 = vmatpush1.bf16.msra.mxu0 %v492
    %678 = vmatprep.subr.bf16.mxu0 %v497
    %679 = vmatpush1.bf16.msra.mxu0 %v496
    %680 = vmatprep.subr.bf16.mxu0 %v501
    %681 = vmatpush1.bf16.msra.mxu0 %v500
    %682 = vmatprep.subr.bf16.mxu0 %v505
    %683 = vmatpush1.bf16.msra.mxu0 %v504
    %684 = vmatprep.subr.bf16.mxu0 %v509
    %685 = vmatpush1.bf16.msra.mxu0 %v508
    %686 = vmatprep.subr.bf16.mxu0 %v513
    %687 = vmatpush1.bf16.msra.mxu0 %v512
    %688 = vmatprep.subr.bf16.mxu0 %v517
    %689 = vmatpush1.bf16.msra.mxu0 %v516
    %690 = vmatprep.subr.bf16.mxu0 %v521
    %691 = vmatpush1.bf16.msra.mxu0 %v520
    %692 = vmatprep.subr.bf16.mxu0 %v525
    %693 = vmatpush1.bf16.msra.mxu0 %v524
    %694 = vmatprep.subr.bf16.mxu0 %v529
    %695 = vmatpush1.bf16.msra.mxu0 %v528
    %696 = vmatprep.subr.bf16.mxu0 %v533
    %697 = vmatpush1.bf16.msra.mxu0 %v532
    %698 = vmatprep.subr.bf16.mxu0 %v537
    %699 = vmatpush1.bf16.msra.mxu0 %v536
    %700 = vmatprep.mubr.bf16.mxu0 %v68
    %701 = vmatmul.mubr.bf16.gmra.mrb[0].mxu0 %v67
    %v702 = vpop.f32.mrb[0].mxu0
    %v703 = vadd.f32 %v171, %v702
    %v704 = vpop.f32.mrb[0].mxu0
    %v705 = vadd.f32 %v175, %v704
    %v706 = vpop.f32.mrb[0].mxu0
    %v707 = vadd.f32 %v171, %v706
    %v708 = vpop.f32.mrb[0].mxu0
    %v709 = vadd.f32 %v175, %v708
    %710 = vdwg.mxu0
    %711 = vmatprep.subr.bf16.mxu0 %v541
    %712 = vmatpush1.bf16.msra.mxu0 %v540
    %713 = vmatprep.subr.bf16.mxu0 %v545
    %714 = vmatpush1.bf16.msra.mxu0 %v544
    %715 = vmatprep.subr.bf16.mxu0 %v549
    %716 = vmatpush1.bf16.msra.mxu0 %v548
    %717 = vmatprep.subr.bf16.mxu0 %v553
    %718 = vmatpush1.bf16.msra.mxu0 %v552
    %719 = vmatprep.subr.bf16.mxu0 %v557
    %720 = vmatpush1.bf16.msra.mxu0 %v556
    %721 = vmatprep.subr.bf16.mxu0 %v561
    %722 = vmatpush1.bf16.msra.mxu0 %v560
    %723 = vmatprep.subr.bf16.mxu0 %v565
    %724 = vmatpush1.bf16.msra.mxu0 %v564
    %725 = vmatprep.subr.bf16.mxu0 %v569
    %726 = vmatpush1.bf16.msra.mxu0 %v568
    %727 = vmatprep.subr.bf16.mxu0 0
    %728 = vmatpush1.bf16.msra.mxu0 0
    %729 = vmatprep.subr.bf16.mxu0 0
    %730 = vmatpush1.bf16.msra.mxu0 0
    %731 = vmatprep.subr.bf16.mxu0 0
    %732 = vmatpush1.bf16.msra.mxu0 0
    %733 = vmatprep.subr.bf16.mxu0 0
    %734 = vmatpush1.bf16.msra.mxu0 0
    %735 = vmatprep.subr.bf16.mxu0 0
    %736 = vmatpush1.bf16.msra.mxu0 0
    %737 = vmatprep.subr.bf16.mxu0 0
    %738 = vmatpush1.bf16.msra.mxu0 0
    %739 = vmatprep.subr.bf16.mxu0 0
    %740 = vmatpush1.bf16.msra.mxu0 0
    %741 = vmatprep.subr.bf16.mxu0 0
    %742 = vmatpush1.bf16.msra.mxu0 0
    %743 = vmatprep.mubr.bf16.mxu0 0
    %744 = vmatmul.mubr.bf16.gmra.mrb[0].mxu0 %v69
    %v745 = vpop.f32.mrb[0].mxu0
    %v746 = vadd.f32 %v703, %v745
    %v747 = vpop.f32.mrb[0].mxu0
    %v748 = vadd.f32 %v705, %v747
    %v749 = vpop.f32.mrb[0].mxu0
    %v750 = vadd.f32 %v707, %v749
    %v751 = vpop.f32.mrb[0].mxu0
    %v752 = vadd.f32 %v709, %v751
    %753 = vdwg.mxu0
    %754 = vmatprep.subr.bf16.mxu0 %v479
    %755 = vmatpush1.bf16.msra.mxu0 %v478
    %756 = vmatprep.subr.bf16.mxu0 %v483
    %757 = vmatpush1.bf16.msra.mxu0 %v482
    %758 = vmatprep.subr.bf16.mxu0 %v487
    %759 = vmatpush1.bf16.msra.mxu0 %v486
    %760 = vmatprep.subr.bf16.mxu0 %v491
    %761 = vmatpush1.bf16.msra.mxu0 %v490
    %762 = vmatprep.subr.bf16.mxu0 %v495
    %763 = vmatpush1.bf16.msra.mxu0 %v494
    %764 = vmatprep.subr.bf16.mxu0 %v499
    %765 = vmatpush1.bf16.msra.mxu0 %v498
    %766 = vmatprep.subr.bf16.mxu0 %v503
    %767 = vmatpush1.bf16.msra.mxu0 %v502
    %768 = vmatprep.subr.bf16.mxu0 %v507
    %769 = vmatpush1.bf16.msra.mxu0 %v506
    %770 = vmatprep.subr.bf16.mxu0 %v511
    %771 = vmatpush1.bf16.msra.mxu0 %v510
    %772 = vmatprep.subr.bf16.mxu0 %v515
    %773 = vmatpush1.bf16.msra.mxu0 %v514
    %774 = vmatprep.subr.bf16.mxu0 %v519
    %775 = vmatpush1.bf16.msra.mxu0 %v518
    %776 = vmatprep.subr.bf16.mxu0 %v523
    %777 = vmatpush1.bf16.msra.mxu0 %v522
    %778 = vmatprep.subr.bf16.mxu0 %v527
    %779 = vmatpush1.bf16.msra.mxu0 %v526
    %780 = vmatprep.subr.bf16.mxu0 %v531
    %781 = vmatpush1.bf16.msra.mxu0 %v530
    %782 = vmatprep.subr.bf16.mxu0 %v535
    %783 = vmatpush1.bf16.msra.mxu0 %v534
    %784 = vmatprep.subr.bf16.mxu0 %v539
    %785 = vmatpush1.bf16.msra.mxu0 %v538
    %786 = vmatprep.mubr.bf16.mxu0 %v68
    %787 = vmatmul.mubr.bf16.gmra.mrb[0].mxu0 %v67
    %v788 = vpop.f32.mrb[0].mxu0
    %v789 = vadd.f32 %v179, %v788
    %v790 = vpop.f32.mrb[0].mxu0
    %v791 = vadd.f32 %v183, %v790
    %v792 = vpop.f32.mrb[0].mxu0
    %v793 = vadd.f32 %v179, %v792
    %v794 = vpop.f32.mrb[0].mxu0
    %v795 = vadd.f32 %v183, %v794
    %796 = vdwg.mxu0
    %797 = vmatprep.subr.bf16.mxu0 %v543
    %798 = vmatpush1.bf16.msra.mxu0 %v542
    %799 = vmatprep.subr.bf16.mxu0 %v547
    %800 = vmatpush1.bf16.msra.mxu0 %v546
    %801 = vmatprep.subr.bf16.mxu0 %v551
    %802 = vmatpush1.bf16.msra.mxu0 %v550
    %803 = vmatprep.subr.bf16.mxu0 %v555
    %804 = vmatpush1.bf16.msra.mxu0 %v554
    %805 = vmatprep.subr.bf16.mxu0 %v559
    %806 = vmatpush1.bf16.msra.mxu0 %v558
    %807 = vmatprep.subr.bf16.mxu0 %v563
    %808 = vmatpush1.bf16.msra.mxu0 %v562
    %809 = vmatprep.subr.bf16.mxu0 %v567
    %810 = vmatpush1.bf16.msra.mxu0 %v566
    %811 = vmatprep.subr.bf16.mxu0 %v571
    %812 = vmatpush1.bf16.msra.mxu0 %v570
    %813 = vmatprep.subr.bf16.mxu0 0
    %814 = vmatpush1.bf16.msra.mxu0 0
    %815 = vmatprep.subr.bf16.mxu0 0
    %816 = vmatpush1.bf16.msra.mxu0 0
    %817 = vmatprep.subr.bf16.mxu0 0
    %818 = vmatpush1.bf16.msra.mxu0 0
    %819 = vmatprep.subr.bf16.mxu0 0
    %820 = vmatpush1.bf16.msra.mxu0 0
    %821 = vmatprep.subr.bf16.mxu0 0
    %822 = vmatpush1.bf16.msra.mxu0 0
    %823 = vmatprep.subr.bf16.mxu0 0
    %824 = vmatpush1.bf16.msra.mxu0 0
    %825 = vmatprep.subr.bf16.mxu0 0
    %826 = vmatpush1.bf16.msra.mxu0 0
    %827 = vmatprep.subr.bf16.mxu0 0
    %828 = vmatpush1.bf16.msra.mxu0 0
    %829 = vmatprep.mubr.bf16.mxu0 0
    %830 = vmatmul.mubr.bf16.gmra.mrb[0].mxu0 %v69
    %v831 = vpop.f32.mrb[0].mxu0
    %v832 = vadd.f32 %v789, %v831
    %v833 = vpop.f32.mrb[0].mxu0
    %v834 = vadd.f32 %v791, %v833
    %v835 = vpop.f32.mrb[0].mxu0
    %v836 = vadd.f32 %v793, %v835
    %v837 = vpop.f32.mrb[0].mxu0
    %v838 = vadd.f32 %v795, %v837
    %839 = vdwg.mxu0
    %v840 = vmax.f32 %v746, 0.0
    %v841 = vmax.f32 %v748, 0.0
    %v842 = vmax.f32 %v832, 0.0
    %v843 = vmax.f32 %v834, 0.0
    %v844 = vmax.f32 %v750, 0.0
    %v845 = vmax.f32 %v752, 0.0
    %v846 = vmax.f32 %v836, 0.0
    %v847 = vmax.f32 %v838, 0.0
    %v848 = vpack.c.bf16 %v844, %v840
    %v849 = vpack.c.bf16 %v845, %v841
    %v850 = vpack.c.bf16 %v846, %v842
    %v851 = vpack.c.bf16 %v847, %v843
    %v852 = vld [vmem:[#allocation4] sm:$0xff]
    %v853 = vld [vmem:[#allocation4 + $0x8] sm:$0xff]
    %v854 = vld [vmem:[#allocation4 + $0x10] sm:$0xff]
    %v855 = vld [vmem:[#allocation4 + $0x18] sm:$0xff]
    %v856 = vld [vmem:[#allocation4 + $0x20] sm:$0xff]
    %v857 = vld [vmem:[#allocation4 + $0x28] sm:$0xff]
    %v858 = vld [vmem:[#allocation4 + $0x30] sm:$0xff]
    %v859 = vld [vmem:[#allocation4 + $0x38] sm:$0xff]
    %v860 = vld [vmem:[#allocation4 + $0x40] sm:$0xff]
    %v861 = vld [vmem:[#allocation4 + $0x48] sm:$0xff]
    %v862 = vld [vmem:[#allocation4 + $0x50] sm:$0xff]
    %v863 = vld [vmem:[#allocation4 + $0x58] sm:$0xff]
    %v864 = vld [vmem:[#allocation4 + $0x60] sm:$0xff]
    %v865 = vld [vmem:[#allocation4 + $0x68] sm:$0xff]
    %v866 = vld [vmem:[#allocation4 + $0x70] sm:$0xff]
    %v867 = vld [vmem:[#allocation4 + $0x78] sm:$0xff]
    %v868 = vld [vmem:[#allocation4 + $0x80] sm:$0xff]
    %v869 = vld [vmem:[#allocation4 + $0x88] sm:$0xff]
    %v870 = vld [vmem:[#allocation4 + $0x90] sm:$0xff]
    %v871 = vld [vmem:[#allocation4 + $0x98] sm:$0xff]
    %v872 = vld [vmem:[#allocation4 + $0xa0] sm:$0xff]
    %v873 = vld [vmem:[#allocation4 + $0xa8] sm:$0xff]
    %v874 = vld [vmem:[#allocation4 + $0xb0] sm:$0xff]
    %v875 = vld [vmem:[#allocation4 + $0xb8] sm:$0xff]
    %v876 = vld [vmem:[#allocation4 + $0xc0] sm:$0xff]
    %v877 = vld [vmem:[#allocation4 + $0xc8] sm:$0xff]
    %v878 = vld [vmem:[#allocation4 + $0xd0] sm:$0xff]
    %v879 = vld [vmem:[#allocation4 + $0xd8] sm:$0xff]
    %v880 = vld [vmem:[#allocation4 + $0xe0] sm:$0xff]
    %v881 = vld [vmem:[#allocation4 + $0xe8] sm:$0xff]
    %v882 = vld [vmem:[#allocation4 + $0xf0] sm:$0xff]
    %v883 = vld [vmem:[#allocation4 + $0xf8] sm:$0xff]
    %v884 = vld [vmem:[#allocation4 + $0x100] sm:$0xff]
    %v885 = vld [vmem:[#allocation4 + $0x108] sm:$0xff]
    %v886 = vld [vmem:[#allocation4 + $0x110] sm:$0xff]
    %v887 = vld [vmem:[#allocation4 + $0x118] sm:$0xff]
    %v888 = vld [vmem:[#allocation4 + $0x120] sm:$0xff]
    %v889 = vld [vmem:[#allocation4 + $0x128] sm:$0xff]
    %v890 = vld [vmem:[#allocation4 + $0x130] sm:$0xff]
    %v891 = vld [vmem:[#allocation4 + $0x138] sm:$0xff]
    %v892 = vld [vmem:[#allocation4 + $0x140] sm:$0xff]
    %v893 = vld [vmem:[#allocation4 + $0x148] sm:$0xff]
    %v894 = vld [vmem:[#allocation4 + $0x150] sm:$0xff]
    %v895 = vld [vmem:[#allocation4 + $0x158] sm:$0xff]
    %v896 = vld [vmem:[#allocation4 + $0x160] sm:$0xff]
    %v897 = vld [vmem:[#allocation4 + $0x168] sm:$0xff]
    %v898 = vld [vmem:[#allocation4 + $0x170] sm:$0xff]
    %v899 = vld [vmem:[#allocation4 + $0x178] sm:$0xff]
    %v900 = vld [vmem:[#allocation4 + $0x180] sm:$0xff]
    %v901 = vld [vmem:[#allocation4 + $0x188] sm:$0xff]
    %v902 = vld [vmem:[#allocation4 + $0x190] sm:$0xff]
    %v903 = vld [vmem:[#allocation4 + $0x198] sm:$0xff]
    %v904 = vld [vmem:[#allocation4 + $0x1a0] sm:$0xff]
    %v905 = vld [vmem:[#allocation4 + $0x1a8] sm:$0xff]
    %v906 = vld [vmem:[#allocation4 + $0x1b0] sm:$0xff]
    %v907 = vld [vmem:[#allocation4 + $0x1b8] sm:$0xff]
    %v908 = vld [vmem:[#allocation4 + $0x1c0] sm:$0xff]
    %v909 = vld [vmem:[#allocation4 + $0x1c8] sm:$0xff]
    %v910 = vld [vmem:[#allocation4 + $0x1d0] sm:$0xff]
    %v911 = vld [vmem:[#allocation4 + $0x1d8] sm:$0xff]
    %v912 = vld [vmem:[#allocation4 + $0x1e0] sm:$0xff]
    %v913 = vld [vmem:[#allocation4 + $0x1e8] sm:$0xff]
    %v914 = vld [vmem:[#allocation4 + $0x1f0] sm:$0xff]
    %v915 = vld [vmem:[#allocation4 + $0x1f8] sm:$0xff]
    %v916 = vld [vmem:[%s4] sm:$0x3]
    %v918 = vlaneseq
    %v919 = vshrl.u32 %v918, 7
    %v920 = vsub.s32 0, %v919
    %v921 = vrot.slane %v916, %v920
    %v922 = vlaneseq
    %v923 = vshrl.u32 %v922, 7
    %v924 = vsub.s32 1, %v923
    %v925 = vrot.slane %v916, %v924
    %v992 = vunpack.c.l.b16 %v852
    %v993 = vunpack.c.h.b16 %v852
    %v994 = vunpack.c.l.b16 %v853
    %v995 = vunpack.c.h.b16 %v853
    %v996 = vunpack.c.l.b16 %v854
    %v997 = vunpack.c.h.b16 %v854
    %v998 = vunpack.c.l.b16 %v855
    %v999 = vunpack.c.h.b16 %v855
    %v1000 = vunpack.c.l.b16 %v856
    %v1001 = vunpack.c.h.b16 %v856
    %v1002 = vunpack.c.l.b16 %v857
    %v1003 = vunpack.c.h.b16 %v857
    %v1004 = vunpack.c.l.b16 %v858
    %v1005 = vunpack.c.h.b16 %v858
    %v1006 = vunpack.c.l.b16 %v859
    %v1007 = vunpack.c.h.b16 %v859
    %v1008 = vunpack.c.l.b16 %v860
    %v1009 = vunpack.c.h.b16 %v860
    %v1010 = vunpack.c.l.b16 %v861
    %v1011 = vunpack.c.h.b16 %v861
    %v1012 = vunpack.c.l.b16 %v862
    %v1013 = vunpack.c.h.b16 %v862
    %v1014 = vunpack.c.l.b16 %v863
    %v1015 = vunpack.c.h.b16 %v863
    %v1016 = vunpack.c.l.b16 %v864
    %v1017 = vunpack.c.h.b16 %v864
    %v1018 = vunpack.c.l.b16 %v865
    %v1019 = vunpack.c.h.b16 %v865
    %v1020 = vunpack.c.l.b16 %v866
    %v1021 = vunpack.c.h.b16 %v866
    %v1022 = vunpack.c.l.b16 %v867
    %v1023 = vunpack.c.h.b16 %v867
    %v1024 = vunpack.c.l.b16 %v868
    %v1025 = vunpack.c.h.b16 %v868
    %v1026 = vunpack.c.l.b16 %v869
    %v1027 = vunpack.c.h.b16 %v869
    %v1028 = vunpack.c.l.b16 %v870
    %v1029 = vunpack.c.h.b16 %v870
    %v1030 = vunpack.c.l.b16 %v871
    %v1031 = vunpack.c.h.b16 %v871
    %v1032 = vunpack.c.l.b16 %v872
    %v1033 = vunpack.c.h.b16 %v872
    %v1034 = vunpack.c.l.b16 %v873
    %v1035 = vunpack.c.h.b16 %v873
    %v1036 = vunpack.c.l.b16 %v874
    %v1037 = vunpack.c.h.b16 %v874
    %v1038 = vunpack.c.l.b16 %v875
    %v1039 = vunpack.c.h.b16 %v875
    %v1040 = vunpack.c.l.b16 %v876
    %v1041 = vunpack.c.h.b16 %v876
    %v1042 = vunpack.c.l.b16 %v877
    %v1043 = vunpack.c.h.b16 %v877
    %v1044 = vunpack.c.l.b16 %v878
    %v1045 = vunpack.c.h.b16 %v878
    %v1046 = vunpack.c.l.b16 %v879
    %v1047 = vunpack.c.h.b16 %v879
    %v1048 = vunpack.c.l.b16 %v880
    %v1049 = vunpack.c.h.b16 %v880
    %v1050 = vunpack.c.l.b16 %v881
    %v1051 = vunpack.c.h.b16 %v881
    %v1052 = vunpack.c.l.b16 %v882
    %v1053 = vunpack.c.h.b16 %v882
    %v1054 = vunpack.c.l.b16 %v883
    %v1055 = vunpack.c.h.b16 %v883
    %v1056 = vunpack.c.l.b16 %v884
    %v1057 = vunpack.c.h.b16 %v884
    %v1058 = vunpack.c.l.b16 %v885
    %v1059 = vunpack.c.h.b16 %v885
    %v1060 = vunpack.c.l.b16 %v886
    %v1061 = vunpack.c.h.b16 %v886
    %v1062 = vunpack.c.l.b16 %v887
    %v1063 = vunpack.c.h.b16 %v887
    %v1064 = vunpack.c.l.b16 %v888
    %v1065 = vunpack.c.h.b16 %v888
    %v1066 = vunpack.c.l.b16 %v889
    %v1067 = vunpack.c.h.b16 %v889
    %v1068 = vunpack.c.l.b16 %v890
    %v1069 = vunpack.c.h.b16 %v890
    %v1070 = vunpack.c.l.b16 %v891
    %v1071 = vunpack.c.h.b16 %v891
    %v1072 = vunpack.c.l.b16 %v892
    %v1073 = vunpack.c.h.b16 %v892
    %v1074 = vunpack.c.l.b16 %v893
    %v1075 = vunpack.c.h.b16 %v893
    %v1076 = vunpack.c.l.b16 %v894
    %v1077 = vunpack.c.h.b16 %v894
    %v1078 = vunpack.c.l.b16 %v895
    %v1079 = vunpack.c.h.b16 %v895
    %v1080 = vunpack.c.l.b16 %v896
    %v1081 = vunpack.c.h.b16 %v896
    %v1082 = vunpack.c.l.b16 %v897
    %v1083 = vunpack.c.h.b16 %v897
    %v1084 = vunpack.c.l.b16 %v898
    %v1085 = vunpack.c.h.b16 %v898
    %v1086 = vunpack.c.l.b16 %v899
    %v1087 = vunpack.c.h.b16 %v899
    %v1088 = vunpack.c.l.b16 %v900
    %v1089 = vunpack.c.h.b16 %v900
    %v1090 = vunpack.c.l.b16 %v901
    %v1091 = vunpack.c.h.b16 %v901
    %v1092 = vunpack.c.l.b16 %v902
    %v1093 = vunpack.c.h.b16 %v902
    %v1094 = vunpack.c.l.b16 %v903
    %v1095 = vunpack.c.h.b16 %v903
    %v1096 = vunpack.c.l.b16 %v904
    %v1097 = vunpack.c.h.b16 %v904
    %v1098 = vunpack.c.l.b16 %v905
    %v1099 = vunpack.c.h.b16 %v905
    %v1100 = vunpack.c.l.b16 %v906
    %v1101 = vunpack.c.h.b16 %v906
    %v1102 = vunpack.c.l.b16 %v907
    %v1103 = vunpack.c.h.b16 %v907
    %v1104 = vunpack.c.l.b16 %v908
    %v1105 = vunpack.c.h.b16 %v908
    %v1106 = vunpack.c.l.b16 %v909
    %v1107 = vunpack.c.h.b16 %v909
    %v1108 = vunpack.c.l.b16 %v910
    %v1109 = vunpack.c.h.b16 %v910
    %v1110 = vunpack.c.l.b16 %v911
    %v1111 = vunpack.c.h.b16 %v911
    %v1112 = vunpack.c.l.b16 %v912
    %v1113 = vunpack.c.h.b16 %v912
    %v1114 = vunpack.c.l.b16 %v913
    %v1115 = vunpack.c.h.b16 %v913
    %v1116 = vunpack.c.l.b16 %v914
    %v1117 = vunpack.c.h.b16 %v914
    %v1118 = vunpack.c.l.b16 %v915
    %v1119 = vunpack.c.h.b16 %v915
    %v1120 = vpack.c.b16 %v994, %v992
    %v1121 = vpack.c.b16 %v995, %v993
    %v1122 = vpack.c.b16 %v998, %v996
    %v1123 = vpack.c.b16 %v999, %v997
    %v1124 = vpack.c.b16 %v1002, %v1000
    %v1125 = vpack.c.b16 %v1003, %v1001
    %v1126 = vpack.c.b16 %v1006, %v1004
    %v1127 = vpack.c.b16 %v1007, %v1005
    %v1128 = vpack.c.b16 %v1010, %v1008
    %v1129 = vpack.c.b16 %v1011, %v1009
    %v1130 = vpack.c.b16 %v1014, %v1012
    %v1131 = vpack.c.b16 %v1015, %v1013
    %v1132 = vpack.c.b16 %v1018, %v1016
    %v1133 = vpack.c.b16 %v1019, %v1017
    %v1134 = vpack.c.b16 %v1022, %v1020
    %v1135 = vpack.c.b16 %v1023, %v1021
    %v1136 = vpack.c.b16 %v1026, %v1024
    %v1137 = vpack.c.b16 %v1027, %v1025
    %v1138 = vpack.c.b16 %v1030, %v1028
    %v1139 = vpack.c.b16 %v1031, %v1029
    %v1140 = vpack.c.b16 %v1034, %v1032
    %v1141 = vpack.c.b16 %v1035, %v1033
    %v1142 = vpack.c.b16 %v1038, %v1036
    %v1143 = vpack.c.b16 %v1039, %v1037
    %v1144 = vpack.c.b16 %v1042, %v1040
    %v1145 = vpack.c.b16 %v1043, %v1041
    %v1146 = vpack.c.b16 %v1046, %v1044
    %v1147 = vpack.c.b16 %v1047, %v1045
    %v1148 = vpack.c.b16 %v1050, %v1048
    %v1149 = vpack.c.b16 %v1051, %v1049
    %v1150 = vpack.c.b16 %v1054, %v1052
    %v1151 = vpack.c.b16 %v1055, %v1053
    %v1152 = vpack.c.b16 %v1058, %v1056
    %v1153 = vpack.c.b16 %v1059, %v1057
    %v1154 = vpack.c.b16 %v1062, %v1060
    %v1155 = vpack.c.b16 %v1063, %v1061
    %v1156 = vpack.c.b16 %v1066, %v1064
    %v1157 = vpack.c.b16 %v1067, %v1065
    %v1158 = vpack.c.b16 %v1070, %v1068
    %v1159 = vpack.c.b16 %v1071, %v1069
    %v1160 = vpack.c.b16 %v1074, %v1072
    %v1161 = vpack.c.b16 %v1075, %v1073
    %v1162 = vpack.c.b16 %v1078, %v1076
    %v1163 = vpack.c.b16 %v1079, %v1077
    %v1164 = vpack.c.b16 %v1082, %v1080
    %v1165 = vpack.c.b16 %v1083, %v1081
    %v1166 = vpack.c.b16 %v1086, %v1084
    %v1167 = vpack.c.b16 %v1087, %v1085
    %v1168 = vpack.c.b16 %v1090, %v1088
    %v1169 = vpack.c.b16 %v1091, %v1089
    %v1170 = vpack.c.b16 %v1094, %v1092
    %v1171 = vpack.c.b16 %v1095, %v1093
    %v1172 = vpack.c.b16 %v1098, %v1096
    %v1173 = vpack.c.b16 %v1099, %v1097
    %v1174 = vpack.c.b16 %v1102, %v1100
    %v1175 = vpack.c.b16 %v1103, %v1101
    %v1176 = vpack.c.b16 %v1106, %v1104
    %v1177 = vpack.c.b16 %v1107, %v1105
    %v1178 = vpack.c.b16 %v1110, %v1108
    %v1179 = vpack.c.b16 %v1111, %v1109
    %v1180 = vpack.c.b16 %v1114, %v1112
    %v1181 = vpack.c.b16 %v1115, %v1113
    %v1182 = vpack.c.b16 %v1118, %v1116
    %v1183 = vpack.c.b16 %v1119, %v1117
    %1248 = vmatprep.subr.bf16.mxu0 %v1121
    %1249 = vmatpush1.bf16.msra.mxu0 %v1120
    %1250 = vmatprep.subr.bf16.mxu0 %v1123
    %1251 = vmatpush1.bf16.msra.mxu0 %v1122
    %1252 = vmatprep.subr.bf16.mxu0 %v1125
    %1253 = vmatpush1.bf16.msra.mxu0 %v1124
    %1254 = vmatprep.subr.bf16.mxu0 %v1127
    %1255 = vmatpush1.bf16.msra.mxu0 %v1126
    %1256 = vmatprep.subr.bf16.mxu0 %v1129
    %1257 = vmatpush1.bf16.msra.mxu0 %v1128
    %1258 = vmatprep.subr.bf16.mxu0 %v1131
    %1259 = vmatpush1.bf16.msra.mxu0 %v1130
    %1260 = vmatprep.subr.bf16.mxu0 %v1133
    %1261 = vmatpush1.bf16.msra.mxu0 %v1132
    %1262 = vmatprep.subr.bf16.mxu0 %v1135
    %1263 = vmatpush1.bf16.msra.mxu0 %v1134
    %1264 = vmatprep.subr.bf16.mxu0 %v1137
    %1265 = vmatpush1.bf16.msra.mxu0 %v1136
    %1266 = vmatprep.subr.bf16.mxu0 %v1139
    %1267 = vmatpush1.bf16.msra.mxu0 %v1138
    %1268 = vmatprep.subr.bf16.mxu0 %v1141
    %1269 = vmatpush1.bf16.msra.mxu0 %v1140
    %1270 = vmatprep.subr.bf16.mxu0 %v1143
    %1271 = vmatpush1.bf16.msra.mxu0 %v1142
    %1272 = vmatprep.subr.bf16.mxu0 %v1145
    %1273 = vmatpush1.bf16.msra.mxu0 %v1144
    %1274 = vmatprep.subr.bf16.mxu0 %v1147
    %1275 = vmatpush1.bf16.msra.mxu0 %v1146
    %1276 = vmatprep.subr.bf16.mxu0 %v1149
    %1277 = vmatpush1.bf16.msra.mxu0 %v1148
    %1278 = vmatprep.subr.bf16.mxu0 %v1151
    %1279 = vmatpush1.bf16.msra.mxu0 %v1150
    %1280 = vmatprep.mubr.bf16.mxu0 %v849
    %1281 = vmatmul.mubr.bf16.gmra.mrb[0].mxu0 %v848
    %v1282 = vpop.f32.mrb[0].mxu0
    %v1283 = vadd.f32 %v921, %v1282
    %v1284 = vpop.f32.mrb[0].mxu0
    %v1285 = vadd.f32 %v925, %v1284
    %v1286 = vpop.f32.mrb[0].mxu0
    %v1287 = vadd.f32 %v921, %v1286
    %v1288 = vpop.f32.mrb[0].mxu0
    %v1289 = vadd.f32 %v925, %v1288
    %1290 = vdwg.mxu0
    %1291 = vmatprep.subr.bf16.mxu0 %v1153
    %1292 = vmatpush1.bf16.msra.mxu0 %v1152
    %1293 = vmatprep.subr.bf16.mxu0 %v1155
    %1294 = vmatpush1.bf16.msra.mxu0 %v1154
    %1295 = vmatprep.subr.bf16.mxu0 %v1157
    %1296 = vmatpush1.bf16.msra.mxu0 %v1156
    %1297 = vmatprep.subr.bf16.mxu0 %v1159
    %1298 = vmatpush1.bf16.msra.mxu0 %v1158
    %1299 = vmatprep.subr.bf16.mxu0 %v1161
    %1300 = vmatpush1.bf16.msra.mxu0 %v1160
    %1301 = vmatprep.subr.bf16.mxu0 %v1163
    %1302 = vmatpush1.bf16.msra.mxu0 %v1162
    %1303 = vmatprep.subr.bf16.mxu0 %v1165
    %1304 = vmatpush1.bf16.msra.mxu0 %v1164
    %1305 = vmatprep.subr.bf16.mxu0 %v1167
    %1306 = vmatpush1.bf16.msra.mxu0 %v1166
    %1307 = vmatprep.subr.bf16.mxu0 %v1169
    %1308 = vmatpush1.bf16.msra.mxu0 %v1168
    %1309 = vmatprep.subr.bf16.mxu0 %v1171
    %1310 = vmatpush1.bf16.msra.mxu0 %v1170
    %1311 = vmatprep.subr.bf16.mxu0 %v1173
    %1312 = vmatpush1.bf16.msra.mxu0 %v1172
    %1313 = vmatprep.subr.bf16.mxu0 %v1175
    %1314 = vmatpush1.bf16.msra.mxu0 %v1174
    %1315 = vmatprep.subr.bf16.mxu0 %v1177
    %1316 = vmatpush1.bf16.msra.mxu0 %v1176
    %1317 = vmatprep.subr.bf16.mxu0 %v1179
    %1318 = vmatpush1.bf16.msra.mxu0 %v1178
    %1319 = vmatprep.subr.bf16.mxu0 %v1181
    %1320 = vmatpush1.bf16.msra.mxu0 %v1180
    %1321 = vmatprep.subr.bf16.mxu0 %v1183
    %1322 = vmatpush1.bf16.msra.mxu0 %v1182
    %1323 = vmatprep.mubr.bf16.mxu0 %v851
    %1324 = vmatmul.mubr.bf16.gmra.mrb[0].mxu0 %v850
    %v1325 = vpop.f32.mrb[0].mxu0
    %v1326 = vadd.f32 %v1283, %v1325
    %v1327 = vpop.f32.mrb[0].mxu0
    %v1328 = vadd.f32 %v1285, %v1327
    %v1329 = vpop.f32.mrb[0].mxu0
    %v1330 = vadd.f32 %v1287, %v1329
    %v1331 = vpop.f32.mrb[0].mxu0
    %v1332 = vadd.f32 %v1289, %v1331
    %1333 = vdwg.mxu0
    %v1334 = vmax.f32 %v1326, 0.0
    %v1335 = vmax.f32 %v1328, 0.0
    %v1336 = vmax.f32 %v1330, 0.0
    %v1337 = vmax.f32 %v1332, 0.0
    %v1338 = vpack.c.bf16 %v1336, %v1334
    %v1339 = vpack.c.bf16 %v1337, %v1335
    %v1340 = vld [vmem:[%s5] sm:$0xf]
    %v1341 = vld [vmem:[%s5 + $0x4] sm:$0xf]
    %v1342 = vld [vmem:[%s5 + $0x8] sm:$0xf]
    %v1343 = vld [vmem:[%s5 + $0xc] sm:$0xf]
    %v1344 = vld [vmem:[%s5 + $0x10] sm:$0xf]
    %v1345 = vld [vmem:[%s5 + $0x14] sm:$0xf]
    %v1346 = vld [vmem:[%s5 + $0x18] sm:$0xf]
    %v1347 = vld [vmem:[%s5 + $0x1c] sm:$0xf]
    %v1348 = vld [vmem:[%s5 + $0x20] sm:$0xf]
    %v1349 = vld [vmem:[%s5 + $0x24] sm:$0xf]
    %v1350 = vld [vmem:[%s5 + $0x28] sm:$0xf]
    %v1351 = vld [vmem:[%s5 + $0x2c] sm:$0xf]
    %v1352 = vld [vmem:[%s5 + $0x30] sm:$0xf]
    %v1353 = vld [vmem:[%s5 + $0x34] sm:$0xf]
    %v1354 = vld [vmem:[%s5 + $0x38] sm:$0xf]
    %v1355 = vld [vmem:[%s5 + $0x3c] sm:$0xf]
    %v1356 = vld [vmem:[%s5 + $0x40] sm:$0xf]
    %v1357 = vld [vmem:[%s5 + $0x44] sm:$0xf]
    %v1358 = vld [vmem:[%s5 + $0x48] sm:$0xf]
    %v1359 = vld [vmem:[%s5 + $0x4c] sm:$0xf]
    %v1360 = vld [vmem:[%s5 + $0x50] sm:$0xf]
    %v1361 = vld [vmem:[%s5 + $0x54] sm:$0xf]
    %v1362 = vld [vmem:[%s5 + $0x58] sm:$0xf]
    %v1363 = vld [vmem:[%s5 + $0x5c] sm:$0xf]
    %v1364 = vld [vmem:[%s5 + $0x60] sm:$0xf]
    %v1365 = vld [vmem:[%s5 + $0x64] sm:$0xf]
    %v1366 = vld [vmem:[%s5 + $0x68] sm:$0xf]
    %v1367 = vld [vmem:[%s5 + $0x6c] sm:$0xf]
    %v1368 = vld [vmem:[%s5 + $0x70] sm:$0xf]
    %v1369 = vld [vmem:[%s5 + $0x74] sm:$0xf]
    %v1370 = vld [vmem:[%s5 + $0x78] sm:$0xf]
    %v1371 = vld [vmem:[%s5 + $0x7c] sm:$0xf]
    %v1372 = vld [vmem:[%s6] sm:$0x1]
    %v1374 = vlaneseq
    %v1375 = vshrl.u32 %v1374, 7
    %v1376 = vsub.s32 0, %v1375
    %v1377 = vrot.slane %v1372, %v1376
    %v1411 = vunpack.c.l.b16 %v1340
    %v1412 = vunpack.c.l.b16 %v1341
    %v1413 = vunpack.c.l.b16 %v1342
    %v1414 = vunpack.c.l.b16 %v1343
    %v1415 = vunpack.c.l.b16 %v1344
    %v1416 = vunpack.c.l.b16 %v1345
    %v1417 = vunpack.c.l.b16 %v1346
    %v1418 = vunpack.c.l.b16 %v1347
    %v1419 = vunpack.c.l.b16 %v1348
    %v1420 = vunpack.c.l.b16 %v1349
    %v1421 = vunpack.c.l.b16 %v1350
    %v1422 = vunpack.c.l.b16 %v1351
    %v1423 = vunpack.c.l.b16 %v1352
    %v1424 = vunpack.c.l.b16 %v1353
    %v1425 = vunpack.c.l.b16 %v1354
    %v1426 = vunpack.c.l.b16 %v1355
    %v1427 = vunpack.c.l.b16 %v1356
    %v1428 = vunpack.c.l.b16 %v1357
    %v1429 = vunpack.c.l.b16 %v1358
    %v1430 = vunpack.c.l.b16 %v1359
    %v1431 = vunpack.c.l.b16 %v1360
    %v1432 = vunpack.c.l.b16 %v1361
    %v1433 = vunpack.c.l.b16 %v1362
    %v1434 = vunpack.c.l.b16 %v1363
    %v1435 = vunpack.c.l.b16 %v1364
    %v1436 = vunpack.c.l.b16 %v1365
    %v1437 = vunpack.c.l.b16 %v1366
    %v1438 = vunpack.c.l.b16 %v1367
    %v1439 = vunpack.c.l.b16 %v1368
    %v1440 = vunpack.c.l.b16 %v1369
    %v1441 = vunpack.c.l.b16 %v1370
    %v1442 = vunpack.c.l.b16 %v1371
    %v1443 = vpack.c.b16 %v1412, %v1411
    %v1444 = vpack.c.b16 %v1414, %v1413
    %v1445 = vpack.c.b16 %v1416, %v1415
    %v1446 = vpack.c.b16 %v1418, %v1417
    %v1447 = vpack.c.b16 %v1420, %v1419
    %v1448 = vpack.c.b16 %v1422, %v1421
    %v1449 = vpack.c.b16 %v1424, %v1423
    %v1450 = vpack.c.b16 %v1426, %v1425
    %v1451 = vpack.c.b16 %v1428, %v1427
    %v1452 = vpack.c.b16 %v1430, %v1429
    %v1453 = vpack.c.b16 %v1432, %v1431
    %v1454 = vpack.c.b16 %v1434, %v1433
    %v1455 = vpack.c.b16 %v1436, %v1435
    %v1456 = vpack.c.b16 %v1438, %v1437
    %v1457 = vpack.c.b16 %v1440, %v1439
    %v1458 = vpack.c.b16 %v1442, %v1441
    %1475 = vmatprep.subr.bf16.mxu0 0
    %1476 = vmatpush1.bf16.msra.mxu0 %v1443
    %1477 = vmatprep.subr.bf16.mxu0 0
    %1478 = vmatpush1.bf16.msra.mxu0 %v1444
    %1479 = vmatprep.subr.bf16.mxu0 0
    %1480 = vmatpush1.bf16.msra.mxu0 %v1445
    %1481 = vmatprep.subr.bf16.mxu0 0
    %1482 = vmatpush1.bf16.msra.mxu0 %v1446
    %1483 = vmatprep.subr.bf16.mxu0 0
    %1484 = vmatpush1.bf16.msra.mxu0 %v1447
    %1485 = vmatprep.subr.bf16.mxu0 0
    %1486 = vmatpush1.bf16.msra.mxu0 %v1448
    %1487 = vmatprep.subr.bf16.mxu0 0
    %1488 = vmatpush1.bf16.msra.mxu0 %v1449
    %1489 = vmatprep.subr.bf16.mxu0 0
    %1490 = vmatpush1.bf16.msra.mxu0 %v1450
    %1491 = vmatprep.subr.bf16.mxu0 0
    %1492 = vmatpush1.bf16.msra.mxu0 %v1451
    %1493 = vmatprep.subr.bf16.mxu0 0
    %1494 = vmatpush1.bf16.msra.mxu0 %v1452
    %1495 = vmatprep.subr.bf16.mxu0 0
    %1496 = vmatpush1.bf16.msra.mxu0 %v1453
    %1497 = vmatprep.subr.bf16.mxu0 0
    %1498 = vmatpush1.bf16.msra.mxu0 %v1454
    %1499 = vmatprep.subr.bf16.mxu0 0
    %1500 = vmatpush1.bf16.msra.mxu0 %v1455
    %1501 = vmatprep.subr.bf16.mxu0 0
    %1502 = vmatpush1.bf16.msra.mxu0 %v1456
    %1503 = vmatprep.subr.bf16.mxu0 0
    %1504 = vmatpush1.bf16.msra.mxu0 %v1457
    %1505 = vmatprep.subr.bf16.mxu0 0
    %1506 = vmatpush1.bf16.msra.mxu0 %v1458
    %1507 = vmatprep.mubr.bf16.mxu0 %v1339
    %1508 = vmatmul.mubr.bf16.gmra.mrb[0].mxu0 %v1338
    %v1509 = vpop.f32.mrb[0].mxu0
    %v1510 = vadd.f32 %v1377, %v1509
    %v1511 = vpop.f32.mrb[0].mxu0
    %v1512 = vpop.f32.mrb[0].mxu0
    %v1513 = vadd.f32 %v1377, %v1512
    %v1514 = vpop.f32.mrb[0].mxu0
    %1515 = vdwg.mxu0
    %v1516 = vmax.f32 %v1510, 0.0
    %v1517 = vmax.f32 %v1513, 0.0
    %v1518 = vpack.c.bf16 %v1517, %v1516
    %v1519 = vld [vmem:[%s7] sm:$0xf]
    %v1520 = vld [vmem:[%s7 + $0x4] sm:$0xf]
    %v1521 = vld [vmem:[%s7 + $0x8] sm:$0xf]
    %v1522 = vld [vmem:[%s7 + $0xc] sm:$0xf]
    %v1523 = vld [vmem:[%s7 + $0x10] sm:$0xf]
    %v1524 = vld [vmem:[%s7 + $0x14] sm:$0xf]
    %v1525 = vld [vmem:[%s7 + $0x18] sm:$0xf]
    %v1526 = vld [vmem:[%s7 + $0x1c] sm:$0xf]
    %v1527 = vld [vmem:[%s7 + $0x20] sm:$0xf]
    %v1528 = vld [vmem:[%s7 + $0x24] sm:$0xf]
    %v1529 = vld [vmem:[%s7 + $0x28] sm:$0xf]
    %v1530 = vld [vmem:[%s7 + $0x2c] sm:$0xf]
    %v1531 = vld [vmem:[%s7 + $0x30] sm:$0xf]
    %v1532 = vld [vmem:[%s7 + $0x34] sm:$0xf]
    %v1533 = vld [vmem:[%s7 + $0x38] sm:$0xf]
    %v1534 = vld [vmem:[%s7 + $0x3c] sm:$0xf]
    %v1535 = vld [vmem:[%s8] sm:$0x1]
    %v1537 = vlaneseq
    %v1538 = vshrl.u32 %v1537, 7
    %v1539 = vsub.s32 0, %v1538
    %v1540 = vrot.slane %v1535, %v1539
    %v1558 = vunpack.c.l.b16 %v1519
    %v1559 = vunpack.c.l.b16 %v1520
    %v1560 = vunpack.c.l.b16 %v1521
    %v1561 = vunpack.c.l.b16 %v1522
    %v1562 = vunpack.c.l.b16 %v1523
    %v1563 = vunpack.c.l.b16 %v1524
    %v1564 = vunpack.c.l.b16 %v1525
    %v1565 = vunpack.c.l.b16 %v1526
    %v1566 = vunpack.c.l.b16 %v1527
    %v1567 = vunpack.c.l.b16 %v1528
    %v1568 = vunpack.c.l.b16 %v1529
    %v1569 = vunpack.c.l.b16 %v1530
    %v1570 = vunpack.c.l.b16 %v1531
    %v1571 = vunpack.c.l.b16 %v1532
    %v1572 = vunpack.c.l.b16 %v1533
    %v1573 = vunpack.c.l.b16 %v1534
    %v1574 = vpack.c.b16 %v1559, %v1558
    %v1575 = vpack.c.b16 %v1561, %v1560
    %v1576 = vpack.c.b16 %v1563, %v1562
    %v1577 = vpack.c.b16 %v1565, %v1564
    %v1578 = vpack.c.b16 %v1567, %v1566
    %v1579 = vpack.c.b16 %v1569, %v1568
    %v1580 = vpack.c.b16 %v1571, %v1570
    %v1581 = vpack.c.b16 %v1573, %v1572
    %1590 = vmatprep.subr.bf16.mxu0 0
    %1591 = vmatpush1.bf16.msra.mxu0 %v1574
    %1592 = vmatprep.subr.bf16.mxu0 0
    %1593 = vmatpush1.bf16.msra.mxu0 %v1575
    %1594 = vmatprep.subr.bf16.mxu0 0
    %1595 = vmatpush1.bf16.msra.mxu0 %v1576
    %1596 = vmatprep.subr.bf16.mxu0 0
    %1597 = vmatpush1.bf16.msra.mxu0 %v1577
    %1598 = vmatprep.subr.bf16.mxu0 0
    %1599 = vmatpush1.bf16.msra.mxu0 %v1578
    %1600 = vmatprep.subr.bf16.mxu0 0
    %1601 = vmatpush1.bf16.msra.mxu0 %v1579
    %1602 = vmatprep.subr.bf16.mxu0 0
    %1603 = vmatpush1.bf16.msra.mxu0 %v1580
    %1604 = vmatprep.subr.bf16.mxu0 0
    %1605 = vmatpush1.bf16.msra.mxu0 %v1581
    %1606 = vmatprep.subr.bf16.mxu0 0
    %1607 = vmatpush1.bf16.msra.mxu0 0
    %1608 = vmatprep.subr.bf16.mxu0 0
    %1609 = vmatpush1.bf16.msra.mxu0 0
    %1610 = vmatprep.subr.bf16.mxu0 0
    %1611 = vmatpush1.bf16.msra.mxu0 0
    %1612 = vmatprep.subr.bf16.mxu0 0
    %1613 = vmatpush1.bf16.msra.mxu0 0
    %1614 = vmatprep.subr.bf16.mxu0 0
    %1615 = vmatpush1.bf16.msra.mxu0 0
    %1616 = vmatprep.subr.bf16.mxu0 0
    %1617 = vmatpush1.bf16.msra.mxu0 0
    %1618 = vmatprep.subr.bf16.mxu0 0
    %1619 = vmatpush1.bf16.msra.mxu0 0
    %1620 = vmatprep.subr.bf16.mxu0 0
    %1621 = vmatpush1.bf16.msra.mxu0 0
    %1622 = vmatprep.mubr.bf16.mxu0 0
    %1623 = vmatmul.mubr.bf16.gmra.mrb[0].mxu0 %v1518
    %v1624 = vpop.f32.mrb[0].mxu0
    %v1625 = vadd.f32 %v1540, %v1624
    %v1626 = vpop.f32.mrb[0].mxu0
    %v1627 = vpop.f32.mrb[0].mxu0
    %v1628 = vadd.f32 %v1540, %v1627
    %v1629 = vpop.f32.mrb[0].mxu0
    %1630 = vdwg.mxu0
    %1631 = vst [vmem:[%s9] sm:$0xff] %v1625
    %1632 = vst [vmem:[%s9 + $0x8] sm:$0xff] %v1628
    // Predicated region
    $region46: #{mlp_classifier_forward.1} parent=1 // pred_check
      _
    $region47: #{mlp_classifier_forward.1} parent=1 // pred_check_branch
      %1634 = sbr.rel (0) target = $region49
    $region48: #{mlp_classifier_forward.1} parent=1 // pred_region
      _
    $region49: #{mlp_classifier_forward.1} parent=1 // pred_fallthru
      _
    // Predicated region
    $region50: #{mlp_classifier_forward.1} parent=1 // pred_check
      _
    $region51: #{mlp_classifier_forward.1} parent=1 // pred_check_branch
      %1636 = sbr.rel (0) target = $region53
    $region52: #{mlp_classifier_forward.1} parent=1 // pred_region
      _
    $region53: #{mlp_classifier_forward.1} parent=1 // pred_fallthru
      _
    %1637 = vsyncpa [#allocation3], 1
    %1638 = vsyncpa [#allocation5], 1

</llo_original>
